<compile_context>
chip_gen: v5e
topology: v5e:2x2
jax: 0.10.0
libtpu: 0.0.40
codegen_flags: <defaults>
</compile_context>

<pallas_src>
import math

import jax
import jax.numpy as jnp
from jax.experimental import pallas as pl
from jax.experimental.pallas import tpu as pltpu


# ----------------------------------------------------------------------------
# Helpers
# ----------------------------------------------------------------------------

_VMEM_LIMIT_BYTES = 32 * 1024 * 1024  # explicit scoped-VMEM budget (safe on v5e/v6e/v7x)


def _cparams(semantics):
    return pltpu.CompilerParams(dimension_semantics=semantics,
                                vmem_limit_bytes=_VMEM_LIMIT_BYTES)


def _row_tile(M, max_tile=256):
    """Row tile: whole extent if small, else a sublane-aligned tile (256 fits v7x)."""
    return M if M <= max_tile else max_tile


def _gelu_tanh(x):
    # TODO(synk): HF BERT uses exact erf-GELU; tanh approximation used here.
    c = math.sqrt(2.0 / math.pi)
    return 0.5 * x * (1.0 + jnp.tanh(c * (x + 0.044715 * x * x * x)))


def _layernorm(acc_f32, gamma, beta, eps):
    mu = jnp.mean(acc_f32, axis=-1, keepdims=True)
    var = jnp.mean(jnp.square(acc_f32 - mu), axis=-1, keepdims=True)
    return (acc_f32 - mu) * jax.lax.rsqrt(var + eps) * gamma + beta


# ----------------------------------------------------------------------------
# Pallas kernels
# ----------------------------------------------------------------------------

def embed_ln(we, pe, te_row, gamma, beta, eps, out_dtype):
    """LayerNorm(word_emb + pos_emb + type_emb); the embedding add is fused in-kernel."""
    B, S, H = we.shape

    def kernel(we_ref, pe_ref, te_ref, g_ref, b_ref, o_ref):
        x = (we_ref[0].astype(jnp.float32)
             + pe_ref[...].astype(jnp.float32)
             + te_ref[...].astype(jnp.float32))
        o_ref[0] = _layernorm(x, g_ref[...], b_ref[...], eps).astype(o_ref.dtype)

    return pl.pallas_call(
        kernel,
        out_shape=jax.ShapeDtypeStruct((B, S, H), out_dtype),
        grid=(B,),
        in_specs=[
            pl.BlockSpec((1, S, H), lambda b: (b, 0, 0)),
            pl.BlockSpec((S, H), lambda b: (0, 0)),      # positions, resident
            pl.BlockSpec((1, H), lambda b: (0, 0)),      # token-type 0 row, resident
            pl.BlockSpec((1, H), lambda b: (0, 0)),
            pl.BlockSpec((1, H), lambda b: (0, 0)),
        ],
        out_specs=pl.BlockSpec((1, S, H), lambda b: (b, 0, 0)),
        compiler_params=_cparams(("parallel",)),
    )(we, pe, te_row,
      gamma.reshape(1, H).astype(jnp.float32),
      beta.reshape(1, H).astype(jnp.float32))


def attention_block(x, p, mask_bias, B, S, H, nH, eps, out_dtype):
    """Fused per-layer attention block.

    Computes LayerNorm(x + Wo @ MHSA(x @ Wqkv)) in one kernel per batch element:
      * fused (H,3H) QKV matmul with the 1/sqrt(Dh) scale folded into the Q weights,
      * per-head softmax attention with additive mask bias,
      * lane-dense single store of the concatenated multi-head context,
      * output projection + bias + residual + LayerNorm epilogue.
    """
    Dh = H // nH
    M = B * S
    assert x.shape == (M, H)

    def kernel(x_ref, qkvw_ref, qkvb_ref, ow_ref, ob_ref, g_ref, bt_ref, m_ref, o_ref):
        xv = x_ref[...]                                            # (S, H) bf16
        qkv = jnp.dot(xv, qkvw_ref[...], preferred_element_type=jnp.float32)
        qkv = (qkv + qkvb_ref[...]).astype(xv.dtype)               # (S, 3H) bf16
        bias = m_ref[0]                                            # (1, S) f32

        # TODO(synk): per-head Dh-wide value slices relayout in-register for Dh<128;
        # a head-packed layout (2 heads / vreg) would raise MXU fill for Dh=64.
        ctxs = []
        for h in range(nH):
            q = qkv[:, h * Dh:(h + 1) * Dh]
            k = qkv[:, H + h * Dh:H + (h + 1) * Dh]
            v = qkv[:, 2 * H + h * Dh:2 * H + (h + 1) * Dh]
            s = jax.lax.dot_general(q, k, (((1,), (1,)), ((), ())),
                                    preferred_element_type=jnp.float32)
            s = s + bias
            s = s - jnp.max(s, axis=-1, keepdims=True)
            pr = jnp.exp(s)
            pr = pr * pl.reciprocal(jnp.sum(pr, axis=-1, keepdims=True), approx=True)
            ctxs.append(jnp.dot(pr.astype(xv.dtype), v,
                                preferred_element_type=jnp.float32))

        ctx = jnp.concatenate(ctxs, axis=-1).astype(xv.dtype)       # (S, H) lane-dense
        acc = jnp.dot(ctx, ow_ref[...], preferred_element_type=jnp.float32)
        acc = acc + ob_ref[...] + xv.astype(jnp.float32)            # bias + residual
        o_ref[...] = _layernorm(acc, g_ref[...], bt_ref[...], eps).astype(o_ref.dtype)

    return pl.pallas_call(
        kernel,
        out_shape=jax.ShapeDtypeStruct((M, H), out_dtype),
        grid=(B,),
        in_specs=[
            pl.BlockSpec((S, H), lambda b: (b, 0)),                 # per-batch row block
            pl.BlockSpec((H, 3 * H), lambda b: (0, 0)),             # resident QKV weight
            pl.BlockSpec((1, 3 * H), lambda b: (0, 0)),
            pl.BlockSpec((H, H), lambda b: (0, 0)),                 # resident out weight
            pl.BlockSpec((1, H), lambda b: (0, 0)),
            pl.BlockSpec((1, H), lambda b: (0, 0)),
            pl.BlockSpec((1, H), lambda b: (0, 0)),
            pl.BlockSpec((1, 1, S), lambda b: (b, 0, 0)),           # additive mask bias
        ],
        out_specs=pl.BlockSpec((S, H), lambda b: (b, 0)),
        compiler_params=_cparams(("parallel",)),
    )(x, p["qkv_w"], p["qkv_b"].reshape(1, 3 * H).astype(jnp.float32),
      p["o_w"], p["o_b"].reshape(1, H).astype(jnp.float32),
      p["ln1_g"].reshape(1, H).astype(jnp.float32),
      p["ln1_b"].reshape(1, H).astype(jnp.float32),
      mask_bias)


def ffn_block(x, p, eps, out_dtype):
    """Fused FFN: LayerNorm(x + W2 @ GELU(W1 @ x + b1) + b2); intermediate stays on-chip."""
    M, H = x.shape
    I = p["i_w"].shape[1]
    TM = _row_tile(M)

    def kernel(x_ref, iw_ref, ib_ref, fw_ref, fb_ref, g_ref, bt_ref, o_ref):
        xv = x_ref[...]                                             # (TM, H) bf16
        h = jnp.dot(xv, iw_ref[...], preferred_element_type=jnp.float32) + ib_ref[...]
        h = _gelu_tanh(h).astype(xv.dtype)                          # (TM, I) bf16
        acc = jnp.dot(h, fw_ref[...], preferred_element_type=jnp.float32)
        acc = acc + fb_ref[...] + xv.astype(jnp.float32)            # bias + residual
        o_ref[...] = _layernorm(acc, g_ref[...], bt_ref[...], eps).astype(o_ref.dtype)

    return pl.pallas_call(
        kernel,
        out_shape=jax.ShapeDtypeStruct((M, H), out_dtype),
        grid=(pl.cdiv(M, TM),),
        in_specs=[
            pl.BlockSpec((TM, H), lambda i: (i, 0)),
            pl.BlockSpec((H, I), lambda i: (0, 0)),                 # resident W1
            pl.BlockSpec((1, I), lambda i: (0, 0)),
            pl.BlockSpec((I, H), lambda i: (0, 0)),                 # resident W2
            pl.BlockSpec((1, H), lambda i: (0, 0)),
            pl.BlockSpec((1, H), lambda i: (0, 0)),
            pl.BlockSpec((1, H), lambda i: (0, 0)),
        ],
        out_specs=pl.BlockSpec((TM, H), lambda i: (i, 0)),
        compiler_params=_cparams(("parallel",)),
    )(x, p["i_w"], p["i_b"].reshape(1, I).astype(jnp.float32),
      p["f_w"], p["f_b"].reshape(1, H).astype(jnp.float32),
      p["ln2_g"].reshape(1, H).astype(jnp.float32),
      p["ln2_b"].reshape(1, H).astype(jnp.float32))


def dense(x, w, b, out_dtype=None):
    """y = x @ w + b (used for the no-labels classifier path)."""
    M, K = x.shape
    N = w.shape[1]
    out_dtype = out_dtype or x.dtype
    TM = _row_tile(M)

    def kernel(x_ref, w_ref, b_ref, o_ref):
        acc = jnp.dot(x_ref[...], w_ref[...], preferred_element_type=jnp.float32)
        o_ref[...] = (acc + b_ref[...]).astype(o_ref.dtype)

    return pl.pallas_call(
        kernel,
        out_shape=jax.ShapeDtypeStruct((M, N), out_dtype),
        grid=(pl.cdiv(M, TM),),
        in_specs=[
            pl.BlockSpec((TM, K), lambda i: (i, 0)),
            pl.BlockSpec((K, N), lambda i: (0, 0)),
            pl.BlockSpec((1, N), lambda i: (0, 0)),
        ],
        out_specs=pl.BlockSpec((TM, N), lambda i: (i, 0)),
        compiler_params=_cparams(("parallel",)),
    )(x, w, b.reshape(1, N).astype(jnp.float32))


def classifier_ce(x, w_pad, b_pad, labels, num_labels):
    """Fused (lane-padded) classifier matmul + token-level cross-entropy.

    Emits per-row NLL and validity so the grid axis is fully parallel (both v7x cores
    get work); the tiny final reduction happens in JAX outside the kernel.
    """
    M, H = x.shape
    NPAD = w_pad.shape[1]
    TM = _row_tile(M)
    labels2 = labels.reshape(M, 1).astype(jnp.int32)

    def kernel(x_ref, w_ref, b_ref, lb_ref, logits_ref, nll_ref, valid_ref):
        i = pl.program_id(0)
        acc = jnp.dot(x_ref[...], w_ref[...], preferred_element_type=jnp.float32)
        acc = acc + b_ref[...]
        logits_ref[...] = acc.astype(logits_ref.dtype)

        lb = lb_ref[...]                                            # (TM, 1) int32
        cols = jax.lax.broadcasted_iota(jnp.int32, acc.shape, 1)
        masked = jnp.where(cols < num_labels, acc, jnp.float32(-1e30))
        m = jnp.max(masked, axis=-1, keepdims=True)
        lse = jnp.log(jnp.sum(jnp.exp(masked - m), axis=-1, keepdims=True)) + m
        onehot = (cols == lb).astype(jnp.float32)
        picked = jnp.sum(acc * onehot, axis=-1, keepdims=True)
        rows = i * TM + jax.lax.broadcasted_iota(jnp.int32, lb.shape, 0)
        valid = jnp.where((lb != -100) & (rows < M), 1.0, 0.0).astype(jnp.float32)
        nll_ref[...] = (lse - picked) * valid
        valid_ref[...] = valid

    logits_pad, nll, valid = pl.pallas_call(
        kernel,
        out_shape=(jax.ShapeDtypeStruct((M, NPAD), jnp.float32),
                   jax.ShapeDtypeStruct((M, 1), jnp.float32),
                   jax.ShapeDtypeStruct((M, 1), jnp.float32)),
        grid=(pl.cdiv(M, TM),),
        in_specs=[
            pl.BlockSpec((TM, H), lambda i: (i, 0)),
            pl.BlockSpec((H, NPAD), lambda i: (0, 0)),
            pl.BlockSpec((1, NPAD), lambda i: (0, 0)),
            pl.BlockSpec((TM, 1), lambda i: (i, 0)),
        ],
        out_specs=(pl.BlockSpec((TM, NPAD), lambda i: (i, 0)),
                   pl.BlockSpec((TM, 1), lambda i: (i, 0)),
                   pl.BlockSpec((TM, 1), lambda i: (i, 0))),
        compiler_params=_cparams(("parallel",)),
    )(x, w_pad, b_pad.reshape(1, NPAD).astype(jnp.float32), labels2)

    loss = jnp.sum(nll) / jnp.maximum(jnp.sum(valid), 1.0)
    return logits_pad[:, :num_labels], loss


# ----------------------------------------------------------------------------
# Model (plain-JAX glue around the kernels)
# ----------------------------------------------------------------------------

def bert_ner_forward(params, cfg, input_ids, attention_mask=None, labels=None):
    B, S = input_ids.shape
    H = cfg["hidden"]

    # Embedding gathers are glue; the sum + LayerNorm run fused in a Pallas kernel.
    we = params["word_emb"][input_ids]                  # (B,S,H) bf16 gather
    pe = params["pos_emb"][:S]                          # (S,H)
    te = params["type_emb"][0].reshape(1, H)            # token_type_ids == 0 everywhere
    x = embed_ln(we, pe, te, params["emb_ln_g"], params["emb_ln_b"], cfg["eps"],
                 out_dtype=jnp.bfloat16).reshape(B * S, H)
    # dropout: eval-mode identity

    if attention_mask is None:
        attention_mask = jnp.ones((B, S), jnp.int32)
    mask_bias = ((1.0 - attention_mask.astype(jnp.float32)) * -10000.0).reshape(B, 1, S)

    for p in params["layers"]:
        x = attention_block(x, p, mask_bias, B, S, H, cfg["heads"], cfg["eps"],
                            out_dtype=x.dtype)
        x = ffn_block(x, p, cfg["eps"], out_dtype=x.dtype)

    nl = cfg["num_labels"]
    if labels is not None:
        logits, loss = classifier_ce(x, params["cls_w_pad"], params["cls_b_pad"],
                                     labels.reshape(-1), nl)
        return (loss, logits.reshape(B, S, nl))

    logits_pad = dense(x, params["cls_w_pad"], params["cls_b_pad"],
                       out_dtype=jnp.float32)
    return (logits_pad[:, :nl].reshape(B, S, nl),)


class Bert_NER:
    """Mirrors the torch module API: forward(input_ids, attention_mask, labels)."""

    def __init__(self, params, cfg):
        self.params = params
        self.cfg = cfg

    def forward(self, input_ids, attention_mask=None, labels=None):
        return bert_ner_forward(self.params, self.cfg, input_ids, attention_mask, labels)

    __call__ = forward


def init_params(key, cfg):
    H, I, V = cfg["hidden"], cfg["intermediate"], cfg["vocab"]
    nH = cfg["heads"]
    Dh = H // nH
    scale = 1.0 / math.sqrt(Dh)
    NPAD = max(128, 128 * pl.cdiv(cfg["num_labels"], 128))   # lane-dense classifier
    keys = iter(jax.random.split(key, 256))

    def nrm(shape):
        return (0.02 * jax.random.normal(next(keys), shape)).astype(jnp.float32)

    # Classifier padded to NPAD columns (padding columns are exactly zero and are masked
    # out of the cross-entropy LSE inside the kernel).
    cls_w = nrm((H, cfg["num_labels"]))
    cls_w_pad = jnp.zeros((H, NPAD), jnp.float32).at[:, :cfg["num_labels"]].set(cls_w)

    params = dict(
        word_emb=nrm((V, H)).astype(jnp.bfloat16),
        pos_emb=nrm((cfg["max_pos"], H)).astype(jnp.bfloat16),
        type_emb=nrm((cfg["type_vocab"], H)).astype(jnp.bfloat16),
        emb_ln_g=jnp.ones((H,), jnp.float32),
        emb_ln_b=jnp.zeros((H,), jnp.float32),
        cls_w_pad=cls_w_pad.astype(jnp.bfloat16),
        cls_b_pad=jnp.zeros((NPAD,), jnp.float32),
        layers=[],
    )
    for _ in range(cfg["layers"]):
        q_w, k_w, v_w = nrm((H, H)), nrm((H, H)), nrm((H, H))
        q_b = jnp.zeros((H,), jnp.float32)
        # Fold the 1/sqrt(Dh) attention scale into the Q projection (mathematically
        # equivalent), and fuse Q/K/V into a single (H, 3H) matmul.
        qkv_w = jnp.concatenate([q_w * scale, k_w, v_w], axis=1)
        qkv_b = jnp.concatenate([q_b * scale,
                                 jnp.zeros((H,), jnp.float32),
                                 jnp.zeros((H,), jnp.float32)], axis=0)
        params["layers"].append(dict(
            qkv_w=qkv_w.astype(jnp.bfloat16), qkv_b=qkv_b,
            o_w=nrm((H, H)).astype(jnp.bfloat16), o_b=jnp.zeros((H,), jnp.float32),
            ln1_g=jnp.ones((H,), jnp.float32), ln1_b=jnp.zeros((H,), jnp.float32),
            i_w=nrm((H, I)).astype(jnp.bfloat16), i_b=jnp.zeros((I,), jnp.float32),
            f_w=nrm((I, H)).astype(jnp.bfloat16), f_b=jnp.zeros((H,), jnp.float32),
            ln2_g=jnp.ones((H,), jnp.float32), ln2_b=jnp.zeros((H,), jnp.float32),
        ))
    return params


if __name__ == "__main__":
    # Small, lane-friendly config (hidden a multiple of 128 keeps every block lane-dense).
    cfg = dict(vocab=128, hidden=128, layers=2, heads=4, intermediate=512,
               max_pos=64, type_vocab=2, num_labels=3, eps=1e-12)

    key = jax.random.PRNGKey(0)
    pkey, ikey, lkey = jax.random.split(key, 3)

    params = init_params(pkey, cfg)
    model = Bert_NER(params, cfg)

    B, S = 2, 8
    input_ids = jax.random.randint(ikey, (B, S), 0, cfg["vocab"], dtype=jnp.int32)
    attention_mask = jnp.array([[1, 1, 1, 1, 1, 1, 1, 1],
                                [1, 1, 1, 1, 1, 1, 0, 0]], dtype=jnp.int32)
    labels = jax.random.randint(lkey, (B, S), 0, cfg["num_labels"], dtype=jnp.int32)
    labels = jnp.where(attention_mask == 1, labels, -100)  # ignore padded positions

    loss, logits = model(input_ids, attention_mask=attention_mask, labels=labels)
    jax.block_until_ready((loss, logits))

    assert logits.shape == (B, S, cfg["num_labels"])
    assert loss.shape == ()
    assert bool(jnp.isfinite(loss)) and bool(jnp.all(jnp.isfinite(logits)))

    # Also exercise the no-labels path: returns (logits,)
    (logits_only,) = model(input_ids, attention_mask=attention_mask)
    jax.block_until_ready(logits_only)
    assert logits_only.shape == (B, S, cfg["num_labels"])

    print("KERNEL_OK")
</pallas_src>

<mosaic_0001>
module attributes {stable_mosaic.version = 11 : i64} {
  func.func @kernel(%arg0: i32, %arg1: memref<1x8x128xbf16, #tpu.memory_space<vmem>>, %arg2: memref<8x128xbf16, #tpu.memory_space<vmem>>, %arg3: memref<1x128xbf16, #tpu.memory_space<vmem>>, %arg4: memref<1x128xf32, #tpu.memory_space<vmem>>, %arg5: memref<1x128xf32, #tpu.memory_space<vmem>>, %arg6: memref<1x8x128xbf16, #tpu.memory_space<vmem>>) attributes {dimension_semantics = [#tpu.dimension_semantics<parallel>], iteration_bounds = array<i64: 2>, scalar_prefetch = 0 : i64, scratch_operands = 0 : i64, tpu.core_type = #tpu.core_type<tc>, window_params = [{transform_indices = @transform_0, window_bounds = array<i64: 1, 8, 128>}, {pipeline_mode = #tpu.pipeline_mode<synchronous>, transform_indices = @transform_1, window_bounds = array<i64: 8, 128>}, {pipeline_mode = #tpu.pipeline_mode<synchronous>, transform_indices = @transform_2, window_bounds = array<i64: 1, 128>}, {pipeline_mode = #tpu.pipeline_mode<synchronous>, transform_indices = @transform_3, window_bounds = array<i64: 1, 128>}, {pipeline_mode = #tpu.pipeline_mode<synchronous>, transform_indices = @transform_4, window_bounds = array<i64: 1, 128>}, {transform_indices = @transform_5, window_bounds = array<i64: 1, 8, 128>}]} {
    %c0 = arith.constant 0 : index
    %c0_0 = arith.constant 0 : index
    %c0_1 = arith.constant 0 : index
    %0 = vector.load %arg1[%c0, %c0_0, %c0_1] : memref<1x8x128xbf16, #tpu.memory_space<vmem>>, vector<1x8x128xbf16>
    %1 = vector.shape_cast %0 : vector<1x8x128xbf16> to vector<8x128xbf16>
    %2 = arith.extf %1 : vector<8x128xbf16> to vector<8x128xf32>
    %c0_2 = arith.constant 0 : index
    %c0_3 = arith.constant 0 : index
    %3 = vector.load %arg2[%c0_2, %c0_3] : memref<8x128xbf16, #tpu.memory_space<vmem>>, vector<8x128xbf16>
    %4 = arith.extf %3 : vector<8x128xbf16> to vector<8x128xf32>
    %5 = arith.addf %2, %4 : vector<8x128xf32>
    %c0_4 = arith.constant 0 : index
    %c0_5 = arith.constant 0 : index
    %6 = vector.load %arg3[%c0_4, %c0_5] : memref<1x128xbf16, #tpu.memory_space<vmem>>, vector<1x128xbf16>
    %7 = arith.extf %6 : vector<1x128xbf16> to vector<1x128xf32>
    %8 = vector.broadcast %7 : vector<1x128xf32> to vector<8x128xf32>
    %9 = arith.addf %5, %8 : vector<8x128xf32>
    %c0_6 = arith.constant 0 : index
    %c0_7 = arith.constant 0 : index
    %10 = vector.load %arg4[%c0_6, %c0_7] : memref<1x128xf32, #tpu.memory_space<vmem>>, vector<1x128xf32>
    %c0_8 = arith.constant 0 : index
    %c0_9 = arith.constant 0 : index
    %11 = vector.load %arg5[%c0_8, %c0_9] : memref<1x128xf32, #tpu.memory_space<vmem>>, vector<1x128xf32>
    %cst = arith.constant dense<0.000000e+00> : vector<8xf32>
    %12 = vector.multi_reduction <add>, %9, %cst [1] : vector<8x128xf32> to vector<8xf32>
    %13 = vector.shape_cast %12 : vector<8xf32> to vector<8x1xf32>
    %cst_10 = arith.constant 1.280000e+02 : f32
    %14 = vector.broadcast %cst_10 : f32 to vector<8x1xf32>
    %15 = arith.divf %13, %14 : vector<8x1xf32>
    %16 = vector.broadcast %15 : vector<8x1xf32> to vector<8x128xf32>
    %17 = arith.subf %9, %16 : vector<8x128xf32>
    %18 = arith.mulf %17, %17 : vector<8x128xf32>
    %cst_11 = arith.constant dense<0.000000e+00> : vector<8xf32>
    %19 = vector.multi_reduction <add>, %18, %cst_11 [1] : vector<8x128xf32> to vector<8xf32>
    %20 = vector.shape_cast %19 : vector<8xf32> to vector<8x1xf32>
    %cst_12 = arith.constant 1.280000e+02 : f32
    %21 = vector.broadcast %cst_12 : f32 to vector<8x1xf32>
    %22 = arith.divf %20, %21 : vector<8x1xf32>
    %23 = vector.broadcast %15 : vector<8x1xf32> to vector<8x128xf32>
    %24 = arith.subf %9, %23 : vector<8x128xf32>
    %cst_13 = arith.constant 9.99999996E-13 : f32
    %25 = vector.broadcast %cst_13 : f32 to vector<8x1xf32>
    %26 = arith.addf %22, %25 : vector<8x1xf32>
    %27 = math.rsqrt %26 : vector<8x1xf32>
    %28 = vector.broadcast %27 : vector<8x1xf32> to vector<8x128xf32>
    %29 = arith.mulf %24, %28 : vector<8x128xf32>
    %30 = vector.broadcast %10 : vector<1x128xf32> to vector<8x128xf32>
    %31 = arith.mulf %29, %30 : vector<8x128xf32>
    %32 = vector.broadcast %11 : vector<1x128xf32> to vector<8x128xf32>
    %33 = arith.addf %31, %32 : vector<8x128xf32>
    %34 = arith.truncf %33 : vector<8x128xf32> to vector<8x128xbf16>
    %c0_14 = arith.constant 0 : index
    %c0_15 = arith.constant 0 : index
    %c0_16 = arith.constant 0 : index
    %35 = vector.load %arg6[%c0_14, %c0_15, %c0_16] : memref<1x8x128xbf16, #tpu.memory_space<vmem>>, vector<1x8x128xbf16>
    %36 = vector.shape_cast %35 : vector<1x8x128xbf16> to vector<8x128xbf16>
    %37 = vector.shape_cast %34 : vector<8x128xbf16> to vector<1x8x128xbf16>
    tpu.vector_store %arg6[%c0_14, %c0_15, %c0_16], %37 {strides = array<i32>} : memref<1x8x128xbf16, #tpu.memory_space<vmem>>, vector<1x8x128xbf16>,
    return
  }
  func.func @transform_0(%arg0: i32) -> (i32, i32, i32) {
    %c0_i32 = arith.constant 0 : i32
    %c0_i32_0 = arith.constant 0 : i32
    %c0_i32_1 = arith.constant 0 : i32
    return %arg0, %c0_i32, %c0_i32_0 : i32, i32, i32
  }
  func.func @transform_1(%arg0: i32) -> (i32, i32) {
    %c0_i32 = arith.constant 0 : i32
    %c0_i32_0 = arith.constant 0 : i32
    %c0_i32_1 = arith.constant 0 : i32
    return %c0_i32, %c0_i32_0 : i32, i32
  }
  func.func @transform_2(%arg0: i32) -> (i32, i32) {
    %c0_i32 = arith.constant 0 : i32
    %c0_i32_0 = arith.constant 0 : i32
    %c0_i32_1 = arith.constant 0 : i32
    return %c0_i32, %c0_i32_0 : i32, i32
  }
  func.func @transform_3(%arg0: i32) -> (i32, i32) {
    %c0_i32 = arith.constant 0 : i32
    %c0_i32_0 = arith.constant 0 : i32
    %c0_i32_1 = arith.constant 0 : i32
    return %c0_i32, %c0_i32_0 : i32, i32
  }
  func.func @transform_4(%arg0: i32) -> (i32, i32) {
    %c0_i32 = arith.constant 0 : i32
    %c0_i32_0 = arith.constant 0 : i32
    %c0_i32_1 = arith.constant 0 : i32
    return %c0_i32, %c0_i32_0 : i32, i32
  }
  func.func @transform_5(%arg0: i32) -> (i32, i32, i32) {
    %c0_i32 = arith.constant 0 : i32
    %c0_i32_0 = arith.constant 0 : i32
    %c0_i32_1 = arith.constant 0 : i32
    return %arg0, %c0_i32, %c0_i32_0 : i32, i32, i32
  }
}

</mosaic_0001>

<llo_original>
// kernel: tpu_custom_call.1
$region0: #{tpu_custom_call.1}
  #allocation0 [shape = 'u32[]', space=smem, size = 0x4, offset = 0x4, fixed_abs, tag = 'smem constant byte address 0x4 - core index']
  #allocation1 [shape = 'u32[72,128]{1,0:T(1,128)}', space=vmem, size = 0x9000, scoped, tag = 'internal scratch']
  %s0 = inlined_call_operand.hbm [shape: bf16[2,8,128], index: 0, kind: input, shape index: {}]
  %s1 = inlined_call_operand.hbm [shape: bf16[8,128], index: 1, kind: input, shape index: {}]
  %s2 = inlined_call_operand.vmem [shape: bf16[1,128], index: 2, kind: input, shape index: {}]
  %s3 = inlined_call_operand.vmem [shape: f32[1,128], index: 3, kind: input, shape index: {}]
  %s4 = inlined_call_operand.vmem [shape: f32[1,128], index: 4, kind: input, shape index: {}]
  %s5 = inlined_call_operand.hbm [shape: bf16[2,8,128], index: 5, kind: output, shape index: {}]
  %s6 = sld [smem:[#allocation0]]
  $region61: #{tpu_custom_call.1} parent=0
    _
  %s8 = ssub.s32 1, %s6
  %s9 = scalar_select 0, %s8, %s6
  $region1: #{tpu_custom_call.1} parent=0
    #allocation2 [shape = 'u8[4096]{0}', space=vmem, size = 0x1000, scoped, tag = 'input window, operand 0']
    #allocation3 [shape = 's32[2]{0}', space=sflag, size = 0x8, scoped, tag = 'scoped memory for tpu_custom_call.1']
    #allocation4 [shape = 's32[2]{0}', space=sflag, size = 0x8, scoped, tag = 'scoped memory for tpu_custom_call.1']
    #allocation5 [shape = 'u8[2048]{0}', space=vmem, size = 0x800, scoped, tag = 'input window, operand 1, single buffered']
    #allocation6 [shape = 's32[1]{0}', space=sflag, size = 0x4, scoped, tag = 'scoped memory for tpu_custom_call.1']
    #allocation7 [shape = 'u8[4096]{0}', space=vmem, size = 0x1000, scoped, tag = 'output window, operand 0']
    %10 = vsyncpa [#allocation3], 0
    %s11 = scalar_lea.sflag [#allocation3], 1
    %12 = vsyncpa %s11, 0
    %13 = vsyncpa [#allocation6], 0
    %14 = vsyncpa [#allocation4], 0
    %s15 = scalar_lea.sflag [#allocation4], 1
    %16 = vsyncpa %s15, 0
    loop: start=0, step=1, limit=4
    $region2: #{tpu_custom_call.1} parent=1 // loop_pre_header
      _
    $region3: #{tpu_custom_call.1} parent=1 // loop_header
      %s18 = sphi 0, %s22
      %p19 = scmp.ge.s32.totalorder %s18, 4
      %s28 = sphi 0, %s30
      %s31 = sphi 0, %s28
      %s32 = sphi 0, %s31
      %s48 = sphi 0, %s32
      %s52 = sphi 0, %s52
      %s54 = sphi 0, %s52
      %s55 = sphi 0, %s54
      %s69 = sphi 0, %s55
      %s73 = sphi 0, %s73
      %s75 = sphi 0, %s73
      %s76 = sphi 0, %s75
      %s90 = sphi 0, %s76
      %s94 = sphi 0, %s94
      %s96 = sphi 0, %s94
      %s97 = sphi 0, %s96
      %s111 = sphi 0, %s97
      %s115 = sphi 0, %s115
      %s117 = sphi 0, %s115
      %s118 = sphi 0, %s117
      %s132 = sphi 0, %s118
      %s138 = sphi 0, %s140
      %s141 = sphi 0, %s138
      %s142 = sphi 0, %s141
      %s158 = sphi 0, %s142
    $region4: #{tpu_custom_call.1} parent=1 // loop_header_branch
      %21 = sbr.rel (%p19) target = $region8
    $region5: #{tpu_custom_call.1} parent=1 // loop_body
      %s23 = ssub.s32 %s18, 1
      %s24 = ssub.s32 %s18, 2
      %s25 = sadd.s32 %s18, 1
      %s26 = ssub.s32 %s18, %s25
      %p27 = scmp.eq.s32.totalorder %s26, 0
      %s29 = sadd.s32 %s28, 1
      %s30 = scalar_select %p27, %s28, %s29
      %p33 = pneg %p27
      %p34 = scmp.eq.s32.totalorder %s18, 1
      %p35 = por %p33, %p34
      %p36 = scmp.ne.s32.totalorder %s28, %s31
      %p37 = scmp.eq.s32.totalorder %s18, 0
      %p38 = por %p36, %p37
      %p39 = scmp.ne.s32.totalorder %s28, %s31
      %p40 = scmp.eq.s32.totalorder %s23, 1
      %p41 = por %p39, %p40
      %p42 = scmp.ne.s32.totalorder %s31, %s32
      %p43 = scmp.eq.s32.totalorder %s23, 0
      %p44 = por %p42, %p43
      %p45 = scmp.ne.s32.totalorder %s31, %s32
      %p46 = scmp.eq.s32.totalorder %s24, 1
      %p47 = por %p45, %p46
      %p49 = scmp.ne.s32.totalorder %s32, %s48
      %p50 = scmp.eq.s32.totalorder %s24, 0
      %p51 = por %p49, %p50
      %s53 = sadd.s32 %s52, 1
      %p56 = scmp.eq.s32.totalorder %s18, 1
      %p57 = scmp.ne.s32.totalorder %s52, %s54
      %p58 = scmp.eq.s32.totalorder %s18, 0
      %p59 = por %p57, %p58
      %p60 = scmp.ne.s32.totalorder %s52, %s54
      %p61 = scmp.eq.s32.totalorder %s23, 1
      %p62 = por %p60, %p61
      %p63 = scmp.ne.s32.totalorder %s54, %s55
      %p64 = scmp.eq.s32.totalorder %s23, 0
      %p65 = por %p63, %p64
      %p66 = scmp.ne.s32.totalorder %s54, %s55
      %p67 = scmp.eq.s32.totalorder %s24, 1
      %p68 = por %p66, %p67
      %p70 = scmp.ne.s32.totalorder %s55, %s69
      %p71 = scmp.eq.s32.totalorder %s24, 0
      %p72 = por %p70, %p71
      %s74 = sadd.s32 %s73, 1
      %p77 = scmp.eq.s32.totalorder %s18, 1
      %p78 = scmp.ne.s32.totalorder %s73, %s75
      %p79 = scmp.eq.s32.totalorder %s18, 0
      %p80 = por %p78, %p79
      %p81 = scmp.ne.s32.totalorder %s73, %s75
      %p82 = scmp.eq.s32.totalorder %s23, 1
      %p83 = por %p81, %p82
      %p84 = scmp.ne.s32.totalorder %s75, %s76
      %p85 = scmp.eq.s32.totalorder %s23, 0
      %p86 = por %p84, %p85
      %p87 = scmp.ne.s32.totalorder %s75, %s76
      %p88 = scmp.eq.s32.totalorder %s24, 1
      %p89 = por %p87, %p88
      %p91 = scmp.ne.s32.totalorder %s76, %s90
      %p92 = scmp.eq.s32.totalorder %s24, 0
      %p93 = por %p91, %p92
      %s95 = sadd.s32 %s94, 1
      %p98 = scmp.eq.s32.totalorder %s18, 1
      %p99 = scmp.ne.s32.totalorder %s94, %s96
      %p100 = scmp.eq.s32.totalorder %s18, 0
      %p101 = por %p99, %p100
      %p102 = scmp.ne.s32.totalorder %s94, %s96
      %p103 = scmp.eq.s32.totalorder %s23, 1
      %p104 = por %p102, %p103
      %p105 = scmp.ne.s32.totalorder %s96, %s97
      %p106 = scmp.eq.s32.totalorder %s23, 0
      %p107 = por %p105, %p106
      %p108 = scmp.ne.s32.totalorder %s96, %s97
      %p109 = scmp.eq.s32.totalorder %s24, 1
      %p110 = por %p108, %p109
      %p112 = scmp.ne.s32.totalorder %s97, %s111
      %p113 = scmp.eq.s32.totalorder %s24, 0
      %p114 = por %p112, %p113
      %s116 = sadd.s32 %s115, 1
      %p119 = scmp.eq.s32.totalorder %s18, 1
      %p120 = scmp.ne.s32.totalorder %s115, %s117
      %p121 = scmp.eq.s32.totalorder %s18, 0
      %p122 = por %p120, %p121
      %p123 = scmp.ne.s32.totalorder %s115, %s117
      %p124 = scmp.eq.s32.totalorder %s23, 1
      %p125 = por %p123, %p124
      %p126 = scmp.ne.s32.totalorder %s117, %s118
      %p127 = scmp.eq.s32.totalorder %s23, 0
      %p128 = por %p126, %p127
      %p129 = scmp.ne.s32.totalorder %s117, %s118
      %p130 = scmp.eq.s32.totalorder %s24, 1
      %p131 = por %p129, %p130
      %p133 = scmp.ne.s32.totalorder %s118, %s132
      %p134 = scmp.eq.s32.totalorder %s24, 0
      %p135 = por %p133, %p134
      %s136 = ssub.s32 %s18, %s25
      %p137 = scmp.eq.s32.totalorder %s136, 0
      %s139 = sadd.s32 %s138, 1
      %s140 = scalar_select %p137, %s138, %s139
      %p143 = pneg %p137
      %p144 = scmp.eq.s32.totalorder %s18, 1
      %p145 = por %p143, %p144
      %p146 = scmp.ne.s32.totalorder %s138, %s141
      %p147 = scmp.eq.s32.totalorder %s18, 0
      %p148 = por %p146, %p147
      %p149 = scmp.ne.s32.totalorder %s138, %s141
      %p150 = scmp.eq.s32.totalorder %s23, 1
      %p151 = por %p149, %p150
      %p152 = scmp.ne.s32.totalorder %s141, %s142
      %p153 = scmp.eq.s32.totalorder %s23, 0
      %p154 = por %p152, %p153
      %p155 = scmp.ne.s32.totalorder %s141, %s142
      %p156 = scmp.eq.s32.totalorder %s24, 1
      %p157 = por %p155, %p156
      %p159 = scmp.ne.s32.totalorder %s142, %s158
      %p160 = scmp.eq.s32.totalorder %s24, 0
      %p161 = por %p159, %p160
      %p162 = scmp.le.s32.totalorder 1, %s18
      %p163 = scmp.lt.s32.totalorder %s18, 3
      %p164 = pnand %p162, %p163
      %p165 = pneg %p164
      // Predicated region
      $region9: #{tpu_custom_call.1} parent=5 // pred_check
        _
      $region10: #{tpu_custom_call.1} parent=5 // pred_check_branch
        %167 = sbr.rel (%p164) target = $region12
      $region11: #{tpu_custom_call.1} parent=5 // pred_region
        %s168 = ssub.s32 %s18, 1
        // Predicated region
        $region13: #{tpu_custom_call.1} parent=11 // pred_check
          %p169 = pneg %p65
        $region14: #{tpu_custom_call.1} parent=11 // pred_check_branch
          %171 = sbr.rel (%p169) target = $region16
        $region15: #{tpu_custom_call.1} parent=11 // pred_region
          %173 = vsyncadd [#allocation6], 0
          %s175 = sshll.u32 %s1, 4
          %s176 = int_to_ptr.hbm [resolvable:$true] %s175
          %s177 = sshll.u32 [#allocation5], 4
          %s178 = int_to_ptr.vmem [resolvable:$true] %s177
          %180 = dma.hbm_to_vmem [thread:$0]  %s176, 64, %s178, [#allocation6]
        $region16: #{tpu_custom_call.1} parent=11 // pred_fallthru
          _
        // Predicated region
        $region17: #{tpu_custom_call.1} parent=11 // pred_check
          %p181 = pneg %p86
        $region18: #{tpu_custom_call.1} parent=11 // pred_check_branch
          %183 = sbr.rel (%p181) target = $region20
        $region19: #{tpu_custom_call.1} parent=11 // pred_region
          _
        $region20: #{tpu_custom_call.1} parent=11 // pred_fallthru
          _
        // Predicated region
        $region21: #{tpu_custom_call.1} parent=11 // pred_check
          %p184 = pneg %p107
        $region22: #{tpu_custom_call.1} parent=11 // pred_check_branch
          %186 = sbr.rel (%p184) target = $region24
        $region23: #{tpu_custom_call.1} parent=11 // pred_region
          _
        $region24: #{tpu_custom_call.1} parent=11 // pred_fallthru
          _
        // Predicated region
        $region25: #{tpu_custom_call.1} parent=11 // pred_check
          %p187 = pneg %p128
        $region26: #{tpu_custom_call.1} parent=11 // pred_check_branch
          %189 = sbr.rel (%p187) target = $region28
        $region27: #{tpu_custom_call.1} parent=11 // pred_region
          _
        $region28: #{tpu_custom_call.1} parent=11 // pred_fallthru
          _
      $region12: #{tpu_custom_call.1} parent=5 // pred_fallthru
        _
      %p190 = scmp.lt.s32.totalorder %s18, 2
      // Predicated region
      $region29: #{tpu_custom_call.1} parent=5 // pred_check
        %p191 = pneg %p190
      $region30: #{tpu_custom_call.1} parent=5 // pred_check_branch
        %193 = sbr.rel (%p191) target = $region32
      $region31: #{tpu_custom_call.1} parent=5 // pred_region
        // Predicated region
        $region33: #{tpu_custom_call.1} parent=31 // pred_check
          %p194 = pneg %p38
        $region34: #{tpu_custom_call.1} parent=31 // pred_check_branch
          %196 = sbr.rel (%p194) target = $region36
        $region35: #{tpu_custom_call.1} parent=31 // pred_region
          %s197 = sand.u32 %s28, 1
          %s198 = scalar_lea.sflag [#allocation3], %s197
          %s199 = sand.u32 %s28, 1
          %s200 = smul.addr %s199, 4
          %s201 = scalar_lea.vmem [#allocation2], %s200
          %203 = vsyncadd %s198, 0
          %s204 = smul.addr %s18, 4
          %s205 = scalar_lea.hbm %s0, %s204
          %s207 = sshll.u32 %s205, 4
          %s208 = int_to_ptr.hbm [resolvable:$true] %s207
          %s209 = sshll.u32 %s201, 4
          %s210 = int_to_ptr.vmem [resolvable:$true] %s209
          %212 = dma.hbm_to_vmem [thread:$0]  %s208, 64, %s210, %s198
        $region36: #{tpu_custom_call.1} parent=31 // pred_fallthru
          _
      $region32: #{tpu_custom_call.1} parent=5 // pred_fallthru
        _
      %p213 = scmp.le.s32.totalorder 1, %s18
      %p214 = scmp.lt.s32.totalorder %s18, 3
      %p215 = pnand %p213, %p214
      %p216 = pneg %p215
      // Predicated region
      $region37: #{tpu_custom_call.1} parent=5 // pred_check
        _
      $region38: #{tpu_custom_call.1} parent=5 // pred_check_branch
        %218 = sbr.rel (%p215) target = $region40
      $region39: #{tpu_custom_call.1} parent=5 // pred_region
        %s219 = ssub.s32 %s18, 1
        %s220 = sand.u32 %s31, 1
        %s221 = scalar_lea.sflag [#allocation3], %s220
        %s222 = sand.u32 %s31, 1
        %s223 = smul.addr %s222, 4
        %s224 = scalar_lea.vmem [#allocation2], %s223
        // Predicated region
        $region41: #{tpu_custom_call.1} parent=39 // pred_check
          %p225 = pneg %p44
        $region42: #{tpu_custom_call.1} parent=39 // pred_check_branch
          %227 = sbr.rel (%p225) target = $region44
        $region43: #{tpu_custom_call.1} parent=39 // pred_region
          %229 = dma.done %s221, 64
        $region44: #{tpu_custom_call.1} parent=39 // pred_fallthru
          _
        // Predicated region
        $region45: #{tpu_custom_call.1} parent=39 // pred_check
          %p230 = pneg %p65
        $region46: #{tpu_custom_call.1} parent=39 // pred_check_branch
          %232 = sbr.rel (%p230) target = $region48
        $region47: #{tpu_custom_call.1} parent=39 // pred_region
          %234 = dma.done [#allocation6], 64
        $region48: #{tpu_custom_call.1} parent=39 // pred_fallthru
          _
        %s235 = sand.u32 %s31, 1
        %s236 = scalar_lea.sflag [#allocation3], %s235
        %s237 = sand.u32 %s31, 1
        %s238 = smul.addr %s237, 4
        %s239 = scalar_lea.vmem [#allocation2], %s238
        %p240 = pneg %p44
        %p241 = pneg %p41
        %p242 = pneg %p65
        %p243 = pneg %p62
        %p244 = pneg %p86
        %p245 = pneg %p83
        %p246 = pneg %p107
        %p247 = pneg %p104
        %p248 = pneg %p128
        %p249 = pneg %p125
        %p250 = pneg %p154
        %p251 = pneg %p151
        %s252 = sand.u32 %s141, 1
        %s253 = scalar_lea.sflag [#allocation4], %s252
        %s254 = sand.u32 %s141, 1
        %s255 = smul.addr %s254, 4
        %s256 = scalar_lea.vmem [#allocation7], %s255
        %v257 = vld [vmem:[%s224] sm:$0xf]
        %v258 = vunpack.c.l.bf16 %v257
        %v259 = vld [vmem:[#allocation5] sm:$0xf]
        %v260 = vunpack.c.l.bf16 %v259
        %v261 = vadd.f32 %v258, %v260
        %v262 = vld [vmem:[%s2] sm:$0x1]
        %v263 = vunpack.c.l.bf16 %v262
        %v264 = vperm.slane %v263, 0
        %v265 = vadd.f32 %v261, %v264
        %v266 = vld [vmem:[%s3] sm:$0x1]
        %v267 = vld [vmem:[%s4] sm:$0x1]
        %268 = vadd.xlane.f32.xlu0 %v265
        %v269 = vpop.xlane.xlu0 %268
        %v270 = vrcp.pop 128.0
        %v271 = vmul.f32 128.0, %v270
        %v272 = vsub.f32 1.0, %v271
        %v273 = vmul.f32 %v270, %v272
        %v274 = vadd.f32 %v270, %v273
        %vm275 = vweird.f32 %v270
        %v276 = vsel %vm275, %v270, %v274
        %v277 = vmul.f32 %v269, %v276
        %v278 = vsub.f32 %v265, %v277
        %v279 = vmul.f32 %v278, %v278
        %280 = vadd.xlane.f32.xlu0 %v279
        %v281 = vpop.xlane.xlu0 %280
        %v282 = vmul.f32 %v281, %v276
        %v283 = vadd.f32 %v282, 1e-12
        %v284 = vrsqrt.pop %v283
        %v285 = vmul.f32 %v284, %v283
        %v286 = vmul.f32 %v285, %v284
        %v287 = vmul.f32 0.5, %v286
        %v288 = vsub.f32 1.5, %v287
        %v289 = vmul.f32 %v284, %v288
        %vm290 = vweird.f32 %v283
        %vm291 = vweird.f32 %v284
        %vm292 = vmor %vm290, %vm291
        %v293 = vsel %vm292, %v284, %v289
        %v294 = vmul.f32 %v278, %v293
        %v296 = vperm.slane %v266, 0
        %v298 = vmul.f32 %v294, %v296
        %v300 = vperm.slane %v267, 0
        %v302 = vadd.f32 %v298, %v300
        %v303 = vpack.c.bf16 %v302, %v302
        %304 = vst [vmem:[%s256] sm:$0xf] %v303
        %s305 = sand.u32 %s141, 1
        %s306 = scalar_lea.sflag [#allocation4], %s305
        %s307 = sand.u32 %s141, 1
        %s308 = smul.addr %s307, 4
        %s309 = scalar_lea.vmem [#allocation7], %s308
        // Predicated region
        $region49: #{tpu_custom_call.1} parent=39 // pred_check
          %p310 = pneg %p151
        $region50: #{tpu_custom_call.1} parent=39 // pred_check_branch
          %312 = sbr.rel (%p310) target = $region52
        $region51: #{tpu_custom_call.1} parent=39 // pred_region
          %314 = vsyncadd %s306, 0
          %s315 = smul.addr %s23, 4
          %s316 = scalar_lea.hbm %s5, %s315
          %s318 = sshll.u32 %s309, 4
          %s319 = int_to_ptr.vmem [resolvable:$true] %s318
          %s320 = sshll.u32 %s316, 4
          %s321 = int_to_ptr.hbm [resolvable:$true] %s320
          %323 = dma.vmem_to_hbm [thread:$0]  %s319, 64, %s321, %s306
        $region52: #{tpu_custom_call.1} parent=39 // pred_fallthru
          _
      $region40: #{tpu_custom_call.1} parent=5 // pred_fallthru
        _
      %p324 = scmp.le.s32.totalorder 2, %s18
      // Predicated region
      $region53: #{tpu_custom_call.1} parent=5 // pred_check
        %p325 = pneg %p324
      $region54: #{tpu_custom_call.1} parent=5 // pred_check_branch
        %327 = sbr.rel (%p325) target = $region56
      $region55: #{tpu_custom_call.1} parent=5 // pred_region
        %s328 = ssub.s32 %s18, 2
        // Predicated region
        $region57: #{tpu_custom_call.1} parent=55 // pred_check
          %p329 = pneg %p157
        $region58: #{tpu_custom_call.1} parent=55 // pred_check_branch
          %331 = sbr.rel (%p329) target = $region60
        $region59: #{tpu_custom_call.1} parent=55 // pred_region
          %s332 = sand.u32 %s142, 1
          %s333 = scalar_lea.sflag [#allocation4], %s332
          %s334 = sand.u32 %s142, 1
          %s335 = smul.addr %s334, 4
          %s336 = scalar_lea.vmem [#allocation7], %s335
          %338 = dma.done %s333, 64
        $region60: #{tpu_custom_call.1} parent=55 // pred_fallthru
          _
      $region56: #{tpu_custom_call.1} parent=5 // pred_fallthru
        _
    $region6: #{tpu_custom_call.1} parent=1 // loop_footer
      %s22 = sadd.s32 1, %s18
    $region7: #{tpu_custom_call.1} parent=1 // loop_footer_branch
      %17 = sbr.rel target = $region3
    $region8: #{tpu_custom_call.1} parent=1 // loop_exit
      _
    %339 = vsyncpa [#allocation3], 1
    %s340 = scalar_lea.sflag [#allocation3], 1
    %341 = vsyncpa %s340, 1
    %342 = vsyncpa [#allocation6], 1
    %343 = vsyncpa [#allocation4], 1
    %s344 = scalar_lea.sflag [#allocation4], 1
    %345 = vsyncpa %s344, 1

</llo_original>
